<compile_context>
chip_gen: v7x
topology: tpu7x:2x2x1
jax: 0.10.0
libtpu: 0.0.40
codegen_flags: <defaults>
</compile_context>

<pallas_src>
import functools

import jax
import jax.numpy as jnp
from jax.experimental import pallas as pl
from jax.experimental.pallas import tpu as pltpu

LN_EPS = 1e-5


def _ffn_kernel(x_ref, gamma_ref, beta_ref, w1_ref, b1_ref, w2_ref, b2_ref,
                o_ref, xn_ref, acc_ref, *, inv_h, silu_bf16):
    """Grid: (row tile i ['parallel'], ffn tile f ['arbitrary', innermost]).

    x_ref:  (tm, H)   input row tile (resident across f)
    w1_ref: (H, tf)   bf16 weight tile of linear1
    b1_ref: (1, tf)   f32
    w2_ref: (tf, H)   bf16 weight tile of linear2
    b2_ref: (1, H)    f32
    xn_ref: (tm, H)   bf16 scratch -- cached LayerNorm output for this row tile
    acc_ref:(tm, H)   f32 scratch  -- output accumulator over F tiles
    """
    f = pl.program_id(1)
    nf = pl.num_programs(1)

    # ---- LayerNorm + accumulator seed: only on the first F tile ----
    @pl.when(f == 0)
    def _():
        x = x_ref[...].astype(jnp.float32)
        mean = jnp.sum(x, axis=-1, keepdims=True) * inv_h      # sum * (1/H)
        xc = x - mean
        var = jnp.sum(xc * xc, axis=-1, keepdims=True) * inv_h
        xn = xc * jax.lax.rsqrt(var + LN_EPS)                   # rsqrt -> EUP
        xn = (xn * gamma_ref[...].astype(jnp.float32)
              + beta_ref[...].astype(jnp.float32))
        # Cache in bf16 (the MXU operand dtype): no per-F-step cast, half the
        # vld bytes and half the scratch VMEM.
        xn_ref[...] = xn.astype(jnp.bfloat16)
        # Seed the accumulator with the output bias -> no epilogue bias add.
        acc_ref[...] = jnp.broadcast_to(b2_ref[...].astype(jnp.float32),
                                        acc_ref.shape)

    # ---- Linear1 tile (bf16 MXU operands, f32 accumulation) + SiLU ----
    h = jnp.dot(xn_ref[...], w1_ref[...], preferred_element_type=jnp.float32)
    if silu_bf16:
        # v6e/v7x: native bf16 VPU/EUP -> bias-add + SiLU at bf16, feed dot2.
        h = (h + b1_ref[...]).astype(jnp.bfloat16)
        h = h * jax.nn.sigmoid(h)                               # sigmoid -> EUP
    else:
        # v5e: no bf16 VPU/EUP -> f32 elementwise, cast only at MXU boundary.
        h = h + b1_ref[...]
        h = (h * jax.nn.sigmoid(h)).astype(jnp.bfloat16)

    # ---- Linear2 tile, accumulate in f32 ----
    acc_ref[...] += jnp.dot(h, w2_ref[...], preferred_element_type=jnp.float32)

    # ---- Epilogue: write the row tile once all F tiles are accumulated ----
    @pl.when(f == nf - 1)
    def _():
        o_ref[...] = acc_ref[...].astype(o_ref.dtype)


def _chip_config():
    """Trace-time chip query (defensive: falls back to safe defaults)."""
    kind = ""
    try:
        kind = jax.devices()[0].device_kind.lower()
    except Exception:
        pass
    vmem_cap = None
    try:
        vmem_cap = int(pltpu.get_tpu_info().vmem_capacity_bytes)
    except Exception:
        vmem_cap = None
    if not vmem_cap or vmem_cap <= 0:
        vmem_cap = 64 * 2**20 if "v7" in kind else 128 * 2**20
    is_v5 = "v5" in kind
    # Weight-streaming roofline: arithmetic intensity ~= tm FLOP/byte.
    if "v7" in kind:
        tm_stream, tf_cap = 640, 512      # 64 MiB VMEM/TC; 2 TCs stream weights
    elif "v6" in kind:
        tm_stream, tf_cap = 768, 1024     # ~918 TF/s vs ~1.4 TB/s
    elif is_v5:
        tm_stream, tf_cap = 256, 1024     # ~197 TF/s vs ~0.82 TB/s
    else:
        tm_stream, tf_cap = 512, 1024
    return {"vmem_cap": vmem_cap, "silu_bf16": not is_v5,
            "tm_stream": tm_stream, "tf_cap": tf_cap}


def _pick_tf(f_dim, cap):
    """FFN tile: multiple of 128 dividing F (capped), else full F."""
    for cand in (1024, 512, 256, 128):
        if cand <= cap and f_dim % cand == 0:
            return cand
    return f_dim


@jax.jit
def te_naive_net(x, gamma, beta, w1, b1, w2, b2):
    """x: (B, S, H); w1: (H, F) bf16 (pre-cast by caller); w2: (F, H) bf16;
    gamma/beta/b1/b2 as (1, dim) f32."""
    B, S, H = x.shape
    F = w1.shape[1]
    M = B * S

    cfg = _chip_config()                          # static (trace-time) config
    vmem_budget = int(cfg["vmem_cap"] * 4 // 5)   # ~20% headroom

    # Weights should arrive bf16 (cast once by the caller, not per call);
    # fallback cast keeps arbitrary callers working.
    if w1.dtype != jnp.bfloat16:
        w1 = w1.astype(jnp.bfloat16)
    if w2.dtype != jnp.bfloat16:
        w2 = w2.astype(jnp.bfloat16)

    # Keep the full weight pair VMEM-resident (constant block index -> single
    # DMA, never re-streamed) whenever it fits in ~1/3 of the budget.
    resident = 2 * H * F * 2 <= vmem_budget // 3
    if resident:
        tf = F
        tm_target = 512           # only needs to amortize grid-step overhead
    else:
        tf = _pick_tf(F, cfg["tf_cap"])
        tm_target = cfg["tm_stream"]   # weight-streaming roofline

    # Row tile: multiple of 8 sublanes; no wrapper-side padding of x -- the
    # grid uses cdiv and Pallas masks the ragged last row tile.
    tm = min(tm_target, max(8, -(-M // 8) * 8))
    tm -= tm % 8
    tm = max(8, tm)

    def vmem_est(tm_, tf_):
        return (2 * tm_ * H * x.dtype.itemsize        # x tile (2 bufs)
                + 2 * tm_ * H * x.dtype.itemsize      # out tile (2 bufs)
                + 2 * H * tf_ * 2 + 2 * tf_ * H * 2   # w1/w2 tiles (bf16, 2 bufs)
                + 2 * tf_ * 4                         # b1 tile
                + tm_ * H * 2 + tm_ * H * 4           # xn(bf16) + acc(f32)
                + 8 * H * 4)                          # gamma/beta/b2

    # Generation-aware shrink so the tile mix actually fits (v7x: 64 MiB).
    while vmem_est(tm, tf) > vmem_budget:
        if tm > 256:
            tm = max(8, (tm // 2) // 8 * 8)
        elif tf > 128 and F % (tf // 2) == 0:
            tf //= 2
        elif tm > 8:
            tm = max(8, (tm // 2) // 8 * 8)
        else:
            break

    x2d = x.reshape(M, H)
    n_i = pl.cdiv(M, tm)
    n_f = pl.cdiv(F, tf)
    grid = (n_i, n_f)        # rows 'parallel' (dual-TC on v7x), F 'arbitrary'

    # Advisory cost estimate. Weight bytes are re-read per row tile when the F
    # axis is tiled (block index changes across the grid), once when resident.
    weight_passes = 1 if n_f == 1 else n_i
    flops = 4 * M * H * F                         # two matmuls
    transcendentals = M * F + 2 * M               # sigmoid + rsqrt
    bytes_accessed = (x2d.size * x2d.dtype.itemsize
                      + M * H * x.dtype.itemsize
                      + (w1.size + w2.size) * 2 * weight_passes
                      + (gamma.size + beta.size + b1.size + b2.size) * 4)

    vmem_limit = int(min(vmem_budget,
                         max(32 * 2**20, vmem_est(tm, tf) * 5 // 4)))

    kernel = functools.partial(_ffn_kernel, inv_h=1.0 / H,
                               silu_bf16=cfg["silu_bf16"])

    out = pl.pallas_call(
        kernel,
        out_shape=jax.ShapeDtypeStruct((M, H), x.dtype),
        grid_spec=pltpu.PrefetchScalarGridSpec(
            num_scalar_prefetch=0,
            grid=grid,
            in_specs=[
                pl.BlockSpec((tm, H), lambda i, f: (i, 0)),   # x row tile
                pl.BlockSpec((1, H), lambda i, f: (0, 0)),    # gamma
                pl.BlockSpec((1, H), lambda i, f: (0, 0)),    # beta
                pl.BlockSpec((H, tf), lambda i, f: (0, f)),   # w1 tile
                pl.BlockSpec((1, tf), lambda i, f: (0, f)),   # b1 tile
                pl.BlockSpec((tf, H), lambda i, f: (f, 0)),   # w2 tile
                pl.BlockSpec((1, H), lambda i, f: (0, 0)),    # b2
            ],
            out_specs=pl.BlockSpec((tm, H), lambda i, f: (i, 0)),
            scratch_shapes=[
                pltpu.VMEM((tm, H), jnp.bfloat16),  # cached LayerNorm output
                pltpu.VMEM((tm, H), jnp.float32),   # f32 output accumulator
            ],
        ),
        compiler_params=pltpu.CompilerParams(
            dimension_semantics=("parallel", "arbitrary"),
            vmem_limit_bytes=vmem_limit),
        cost_estimate=pl.CostEstimate(
            flops=flops,
            transcendentals=transcendentals,
            bytes_accessed=bytes_accessed),
    )(x2d, gamma, beta, w1, b1, w2, b2)

    return out.reshape(B, S, H)


def reference(x, gamma, beta, w1, b1, w2, b2):
    """Pure-f32 reference (module semantics)."""
    x32 = x.astype(jnp.float32)
    mean = jnp.mean(x32, axis=-1, keepdims=True)
    var = jnp.mean((x32 - mean) ** 2, axis=-1, keepdims=True)
    xn = (x32 - mean) * jax.lax.rsqrt(var + LN_EPS)
    xn = xn * gamma[0] + beta[0]
    h = xn @ w1 + b1[0]
    h = h * jax.nn.sigmoid(h)
    return h @ w2 + b2[0]


if __name__ == "__main__":
    # Small config: batch=2, seq=8, hidden=32, intermediate=128
    B, S, H, F = 2, 8, 32, 128
    key = jax.random.PRNGKey(0)
    kx, kg, kb, kw1, kb1, kw2, kb2 = jax.random.split(key, 7)

    x = jax.random.normal(kx, (B, S, H), dtype=jnp.float32)
    # Deterministic parameter init (synthetic; not a checkpoint load).
    gamma = jnp.ones((1, H), jnp.float32) + 0.01 * jax.random.normal(kg, (1, H))
    beta = 0.01 * jax.random.normal(kb, (1, H), dtype=jnp.float32)
    w1 = jax.random.normal(kw1, (H, F), dtype=jnp.float32) * (1.0 / H) ** 0.5
    b1 = 0.01 * jax.random.normal(kb1, (1, F), dtype=jnp.float32)
    w2 = jax.random.normal(kw2, (F, H), dtype=jnp.float32) * (1.0 / F) ** 0.5
    b2 = 0.01 * jax.random.normal(kb2, (1, H), dtype=jnp.float32)

    # One-time bf16 weight cast OUTSIDE the jitted hot path (perf review:
    # don't re-cast weights on every call).
    w1_bf = w1.astype(jnp.bfloat16)
    w2_bf = w2.astype(jnp.bfloat16)

    out = te_naive_net(x, gamma, beta, w1_bf, b1, w2_bf, b2)
    out = jax.block_until_ready(out)

    ref = reference(x, gamma, beta, w1, b1, w2, b2)
    assert out.shape == (B, S, H)
    # Tolerance loosened vs the pure-f32 reference because the kernel feeds
    # bf16 operands to the MXU (f32 accumulation).
    assert jnp.allclose(out, ref, atol=5e-2, rtol=5e-2), (
        float(jnp.max(jnp.abs(out - ref))))
    print("KERNEL_OK")
</pallas_src>

<mosaic_0001>
module attributes {stable_mosaic.version = 11 : i64} {
  func.func @_ffn_kernel(%arg0: i32, %arg1: i32, %arg2: memref<16x32xf32, #tpu.memory_space<vmem>>, %arg3: memref<1x32xf32, #tpu.memory_space<vmem>>, %arg4: memref<1x32xf32, #tpu.memory_space<vmem>>, %arg5: memref<32x128xbf16, #tpu.memory_space<vmem>>, %arg6: memref<1x128xf32, #tpu.memory_space<vmem>>, %arg7: memref<128x32xbf16, #tpu.memory_space<vmem>>, %arg8: memref<1x32xf32, #tpu.memory_space<vmem>>, %arg9: memref<16x32xf32, #tpu.memory_space<vmem>>, %arg10: memref<16x32xbf16, #tpu.memory_space<vmem>>, %arg11: memref<16x32xf32, #tpu.memory_space<vmem>>) attributes {dimension_semantics = [#tpu.dimension_semantics<parallel>, #tpu.dimension_semantics<arbitrary>], iteration_bounds = array<i64: 1, 1>, scalar_prefetch = 0 : i64, scratch_operands = 2 : i64, tpu.core_type = #tpu.core_type<tc>, window_params = [{transform_indices = @transform_0, window_bounds = array<i64: 16, 32>}, {pipeline_mode = #tpu.pipeline_mode<synchronous>, transform_indices = @transform_1, window_bounds = array<i64: 1, 32>}, {pipeline_mode = #tpu.pipeline_mode<synchronous>, transform_indices = @transform_2, window_bounds = array<i64: 1, 32>}, {transform_indices = @transform_3, window_bounds = array<i64: 32, 128>}, {transform_indices = @transform_4, window_bounds = array<i64: 1, 128>}, {transform_indices = @transform_5, window_bounds = array<i64: 128, 32>}, {pipeline_mode = #tpu.pipeline_mode<synchronous>, transform_indices = @transform_6, window_bounds = array<i64: 1, 32>}, {transform_indices = @transform_7, window_bounds = array<i64: 16, 32>}]} {
    %c0_i32 = arith.constant 0 : i32
    %0 = arith.cmpi eq, %arg1, %c0_i32 : i32
    %1 = arith.extui %0 : i1 to i32
    %c0_i32_0 = arith.constant 0 : i32
    %2 = arith.cmpi ne, %1, %c0_i32_0 : i32
    scf.if %2 {
      %c0_16 = arith.constant 0 : index
      %c0_17 = arith.constant 0 : index
      %24 = vector.load %arg2[%c0_16, %c0_17] : memref<16x32xf32, #tpu.memory_space<vmem>>, vector<16x32xf32>
      %cst_18 = arith.constant dense<0.000000e+00> : vector<16xf32>
      %25 = vector.multi_reduction <add>, %24, %cst_18 [1] : vector<16x32xf32> to vector<16xf32>
      %26 = vector.shape_cast %25 : vector<16xf32> to vector<16x1xf32>
      %cst_19 = arith.constant 3.125000e-02 : f32
      %27 = vector.broadcast %cst_19 : f32 to vector<16x1xf32>
      %28 = arith.mulf %26, %27 : vector<16x1xf32>
      %29 = vector.broadcast %28 : vector<16x1xf32> to vector<16x32xf32>
      %30 = arith.subf %24, %29 : vector<16x32xf32>
      %31 = arith.mulf %30, %30 : vector<16x32xf32>
      %cst_20 = arith.constant dense<0.000000e+00> : vector<16xf32>
      %32 = vector.multi_reduction <add>, %31, %cst_20 [1] : vector<16x32xf32> to vector<16xf32>
      %33 = vector.shape_cast %32 : vector<16xf32> to vector<16x1xf32>
      %cst_21 = arith.constant 3.125000e-02 : f32
      %34 = vector.broadcast %cst_21 : f32 to vector<16x1xf32>
      %35 = arith.mulf %33, %34 : vector<16x1xf32>
      %cst_22 = arith.constant 9.99999974E-6 : f32
      %36 = vector.broadcast %cst_22 : f32 to vector<16x1xf32>
      %37 = arith.addf %35, %36 : vector<16x1xf32>
      %38 = math.rsqrt %37 : vector<16x1xf32>
      %39 = vector.broadcast %38 : vector<16x1xf32> to vector<16x32xf32>
      %40 = arith.mulf %30, %39 : vector<16x32xf32>
      %c0_23 = arith.constant 0 : index
      %c0_24 = arith.constant 0 : index
      %41 = vector.load %arg3[%c0_23, %c0_24] : memref<1x32xf32, #tpu.memory_space<vmem>>, vector<1x32xf32>
      %42 = vector.broadcast %41 : vector<1x32xf32> to vector<16x32xf32>
      %43 = arith.mulf %40, %42 : vector<16x32xf32>
      %c0_25 = arith.constant 0 : index
      %c0_26 = arith.constant 0 : index
      %44 = vector.load %arg4[%c0_25, %c0_26] : memref<1x32xf32, #tpu.memory_space<vmem>>, vector<1x32xf32>
      %45 = vector.broadcast %44 : vector<1x32xf32> to vector<16x32xf32>
      %46 = arith.addf %43, %45 : vector<16x32xf32>
      %47 = arith.truncf %46 : vector<16x32xf32> to vector<16x32xbf16>
      %c0_27 = arith.constant 0 : index
      %c0_28 = arith.constant 0 : index
      %48 = vector.load %arg10[%c0_27, %c0_28] : memref<16x32xbf16, #tpu.memory_space<vmem>>, vector<16x32xbf16>
      tpu.vector_store %arg10[%c0_27, %c0_28], %47 {strides = array<i32>} : memref<16x32xbf16, #tpu.memory_space<vmem>>, vector<16x32xbf16>,
      %c0_29 = arith.constant 0 : index
      %c0_30 = arith.constant 0 : index
      %49 = vector.load %arg8[%c0_29, %c0_30] : memref<1x32xf32, #tpu.memory_space<vmem>>, vector<1x32xf32>
      %50 = vector.shape_cast %49 : vector<1x32xf32> to vector<1x32xf32>
      %51 = vector.broadcast %50 : vector<1x32xf32> to vector<16x32xf32>
      %c0_31 = arith.constant 0 : index
      %c0_32 = arith.constant 0 : index
      %52 = vector.load %arg11[%c0_31, %c0_32] : memref<16x32xf32, #tpu.memory_space<vmem>>, vector<16x32xf32>
      tpu.vector_store %arg11[%c0_31, %c0_32], %51 {strides = array<i32>} : memref<16x32xf32, #tpu.memory_space<vmem>>, vector<16x32xf32>,
    } else {
    }
    %c0 = arith.constant 0 : index
    %c0_1 = arith.constant 0 : index
    %3 = vector.load %arg10[%c0, %c0_1] : memref<16x32xbf16, #tpu.memory_space<vmem>>, vector<16x32xbf16>
    %c0_2 = arith.constant 0 : index
    %c0_3 = arith.constant 0 : index
    %4 = vector.load %arg5[%c0_2, %c0_3] : memref<32x128xbf16, #tpu.memory_space<vmem>>, vector<32x128xbf16>
    %cst = arith.constant dense<0.000000e+00> : vector<16x128xf32>
    %5 = tpu.matmul %3, %4, %cst {dimension_numbers = #tpu.dot_dimension_numbers<[1], [0], [0], [1], [0, 0, 1, 1], [], []>} : vector<16x32xbf16>, vector<32x128xbf16>, vector<16x128xf32> -> vector<16x128xf32>
    %c0_4 = arith.constant 0 : index
    %c0_5 = arith.constant 0 : index
    %6 = vector.load %arg6[%c0_4, %c0_5] : memref<1x128xf32, #tpu.memory_space<vmem>>, vector<1x128xf32>
    %7 = vector.broadcast %6 : vector<1x128xf32> to vector<16x128xf32>
    %8 = arith.addf %5, %7 : vector<16x128xf32>
    %9 = arith.truncf %8 : vector<16x128xf32> to vector<16x128xbf16>
    %10 = arith.negf %9 : vector<16x128xbf16>
    %11 = math.exp %10 : vector<16x128xbf16>
    %cst_6 = arith.constant 1.000000e+00 : bf16
    %12 = vector.broadcast %cst_6 : bf16 to vector<16x128xbf16>
    %13 = arith.addf %12, %11 : vector<16x128xbf16>
    %14 = arith.divf %12, %13 : vector<16x128xbf16>
    %15 = arith.mulf %9, %14 : vector<16x128xbf16>
    %c0_7 = arith.constant 0 : index
    %c0_8 = arith.constant 0 : index
    %16 = vector.load %arg11[%c0_7, %c0_8] : memref<16x32xf32, #tpu.memory_space<vmem>>, vector<16x32xf32>
    %c0_9 = arith.constant 0 : index
    %c0_10 = arith.constant 0 : index
    %17 = vector.load %arg7[%c0_9, %c0_10] : memref<128x32xbf16, #tpu.memory_space<vmem>>, vector<128x32xbf16>
    %cst_11 = arith.constant dense<0.000000e+00> : vector<16x32xf32>
    %18 = tpu.matmul %15, %17, %cst_11 {dimension_numbers = #tpu.dot_dimension_numbers<[1], [0], [0], [1], [0, 0, 1, 1], [], []>} : vector<16x128xbf16>, vector<128x32xbf16>, vector<16x32xf32> -> vector<16x32xf32>
    %19 = arith.addf %16, %18 : vector<16x32xf32>
    %c0_12 = arith.constant 0 : index
    %c0_13 = arith.constant 0 : index
    %20 = vector.load %arg11[%c0_12, %c0_13] : memref<16x32xf32, #tpu.memory_space<vmem>>, vector<16x32xf32>
    tpu.vector_store %arg11[%c0_12, %c0_13], %19 {strides = array<i32>} : memref<16x32xf32, #tpu.memory_space<vmem>>, vector<16x32xf32>,
    %c0_i32_14 = arith.constant 0 : i32
    %21 = arith.cmpi eq, %arg1, %c0_i32_14 : i32
    %22 = arith.extui %21 : i1 to i32
    %c0_i32_15 = arith.constant 0 : i32
    %23 = arith.cmpi ne, %22, %c0_i32_15 : i32
    scf.if %23 {
      %c0_16 = arith.constant 0 : index
      %c0_17 = arith.constant 0 : index
      %24 = vector.load %arg11[%c0_16, %c0_17] : memref<16x32xf32, #tpu.memory_space<vmem>>, vector<16x32xf32>
      %c0_18 = arith.constant 0 : index
      %c0_19 = arith.constant 0 : index
      %25 = vector.load %arg9[%c0_18, %c0_19] : memref<16x32xf32, #tpu.memory_space<vmem>>, vector<16x32xf32>
      tpu.vector_store %arg9[%c0_18, %c0_19], %24 {strides = array<i32>} : memref<16x32xf32, #tpu.memory_space<vmem>>, vector<16x32xf32>,
    } else {
    }
    return
  }
  func.func @transform_0(%arg0: i32, %arg1: i32) -> (i32, i32) {
    %c0_i32 = arith.constant 0 : i32
    %c0_i32_0 = arith.constant 0 : i32
    return %arg0, %c0_i32 : i32, i32
  }
  func.func @transform_1(%arg0: i32, %arg1: i32) -> (i32, i32) {
    %c0_i32 = arith.constant 0 : i32
    %c0_i32_0 = arith.constant 0 : i32
    %c0_i32_1 = arith.constant 0 : i32
    return %c0_i32, %c0_i32_0 : i32, i32
  }
  func.func @transform_2(%arg0: i32, %arg1: i32) -> (i32, i32) {
    %c0_i32 = arith.constant 0 : i32
    %c0_i32_0 = arith.constant 0 : i32
    %c0_i32_1 = arith.constant 0 : i32
    return %c0_i32, %c0_i32_0 : i32, i32
  }
  func.func @transform_3(%arg0: i32, %arg1: i32) -> (i32, i32) {
    %c0_i32 = arith.constant 0 : i32
    %c0_i32_0 = arith.constant 0 : i32
    return %c0_i32, %arg1 : i32, i32
  }
  func.func @transform_4(%arg0: i32, %arg1: i32) -> (i32, i32) {
    %c0_i32 = arith.constant 0 : i32
    %c0_i32_0 = arith.constant 0 : i32
    return %c0_i32, %arg1 : i32, i32
  }
  func.func @transform_5(%arg0: i32, %arg1: i32) -> (i32, i32) {
    %c0_i32 = arith.constant 0 : i32
    %c0_i32_0 = arith.constant 0 : i32
    return %arg1, %c0_i32 : i32, i32
  }
  func.func @transform_6(%arg0: i32, %arg1: i32) -> (i32, i32) {
    %c0_i32 = arith.constant 0 : i32
    %c0_i32_0 = arith.constant 0 : i32
    %c0_i32_1 = arith.constant 0 : i32
    return %c0_i32, %c0_i32_0 : i32, i32
  }
  func.func @transform_7(%arg0: i32, %arg1: i32) -> (i32, i32) {
    %c0_i32 = arith.constant 0 : i32
    %c0_i32_0 = arith.constant 0 : i32
    return %arg0, %c0_i32 : i32, i32
  }
}

</mosaic_0001>

<llo_original>
// kernel: te_naive_net.1
$region0: #{te_naive_net.1}
  #allocation0 [shape = 'u32[]', space=smem, size = 0x4, offset = 0x4, fixed_abs, tag = 'smem constant byte address 0x4 - core index']
  #allocation1 [shape = 'u32[144,128]{1,0:T(1,128)}', space=vmem, size = 0x12000, scoped, tag = 'internal scratch']
  #allocation2 [shape = 'bf16[16,32]{1,0:T(16,128)(2,1)}', space=vmem, size = 0x1000, scoped, tag = 'scratch operand']
  #allocation3 [shape = 'f32[16,32]{1,0:T(8,128)}', space=vmem, size = 0x2000, scoped, tag = 'scratch operand']
  %s0 = inlined_call_operand.vmem [shape: f32[16,32], index: 0, kind: input, shape index: {}]
  %s1 = inlined_call_operand.vmem [shape: f32[1,32], index: 1, kind: input, shape index: {}]
  %s2 = inlined_call_operand.vmem [shape: f32[1,32], index: 2, kind: input, shape index: {}]
  %s3 = inlined_call_operand.vmem [shape: bf16[32,128], index: 3, kind: input, shape index: {}]
  %s4 = inlined_call_operand.vmem [shape: f32[1,128], index: 4, kind: input, shape index: {}]
  %s5 = inlined_call_operand.vmem [shape: bf16[128,32], index: 5, kind: input, shape index: {}]
  %s6 = inlined_call_operand.vmem [shape: f32[1,32], index: 6, kind: input, shape index: {}]
  %s7 = inlined_call_operand.hbm [shape: f32[16,32], index: 7, kind: output, shape index: {}]
  %s8 = sld [smem:[#allocation0]]
  $region46: #{te_naive_net.1} parent=0
    _
  %s10 = ssub.s32 1, %s8
  %s11 = scalar_select 0, %s10, %s8
  $region1: #{te_naive_net.1} parent=0
    #allocation4 [shape = 'u8[8192]{0}', space=vmem, size = 0x2000, scoped, tag = 'output window, operand 0, single buffered']
    #allocation5 [shape = 's32[1]{0}', space=sflag, size = 0x4, scoped, tag = 'scoped memory for te_naive_net.1']
    %12 = vsyncpa [#allocation5], 0
    // Predicated region
    $region2: #{te_naive_net.1} parent=1 // pred_check
      _
    $region3: #{te_naive_net.1} parent=1 // pred_check_branch
      %14 = sbr.rel (0) target = $region5
    $region4: #{te_naive_net.1} parent=1 // pred_region
      _
    $region5: #{te_naive_net.1} parent=1 // pred_fallthru
      _
    // Predicated region
    $region6: #{te_naive_net.1} parent=1 // pred_check
      _
    $region7: #{te_naive_net.1} parent=1 // pred_check_branch
      %16 = sbr.rel (0) target = $region9
    $region8: #{te_naive_net.1} parent=1 // pred_region
      _
    $region9: #{te_naive_net.1} parent=1 // pred_fallthru
      _
    // Predicated region
    $region10: #{te_naive_net.1} parent=1 // pred_check
      _
    $region11: #{te_naive_net.1} parent=1 // pred_check_branch
      %18 = sbr.rel (0) target = $region13
    $region12: #{te_naive_net.1} parent=1 // pred_region
      _
    $region13: #{te_naive_net.1} parent=1 // pred_fallthru
      _
    // Predicated region
    $region14: #{te_naive_net.1} parent=1 // pred_check
      _
    $region15: #{te_naive_net.1} parent=1 // pred_check_branch
      %20 = sbr.rel (0) target = $region17
    $region16: #{te_naive_net.1} parent=1 // pred_region
      _
    $region17: #{te_naive_net.1} parent=1 // pred_fallthru
      _
    // Predicated region
    $region18: #{te_naive_net.1} parent=1 // pred_check
      _
    $region19: #{te_naive_net.1} parent=1 // pred_check_branch
      %22 = sbr.rel (0) target = $region21
    $region20: #{te_naive_net.1} parent=1 // pred_region
      _
    $region21: #{te_naive_net.1} parent=1 // pred_fallthru
      _
    // Predicated region
    $region22: #{te_naive_net.1} parent=1 // pred_check
      _
    $region23: #{te_naive_net.1} parent=1 // pred_check_branch
      %24 = sbr.rel (0) target = $region25
    $region24: #{te_naive_net.1} parent=1 // pred_region
      _
    $region25: #{te_naive_net.1} parent=1 // pred_fallthru
      _
    // Predicated region
    $region26: #{te_naive_net.1} parent=1 // pred_check
      _
    $region27: #{te_naive_net.1} parent=1 // pred_check_branch
      %26 = sbr.rel (0) target = $region29
    $region28: #{te_naive_net.1} parent=1 // pred_region
      _
    $region29: #{te_naive_net.1} parent=1 // pred_fallthru
      _
    %p29 = scmp.eq.s32.totalorder 0, 0
    // Predicated region
    $region30: #{te_naive_net.1} parent=1 // pred_check
      %p30 = pneg %p29
    $region31: #{te_naive_net.1} parent=1 // pred_check_branch
      %32 = sbr.rel (%p30) target = $region33
    $region32: #{te_naive_net.1} parent=1 // pred_region
      %v33 = vld [vmem:[%s0] sm:$0xff]
      %v34 = vld [vmem:[%s0 + $0x8] sm:$0xff]
      %vm35 = vcmask 261120
      %v36 = vsel %vm35, %v33, 0.0
      %37 = vadd.xlane.f32.xlu0 %v36
      %v38 = vpop.xlane.xlu0 %37
      %v39 = vsel %vm35, %v34, 0.0
      %40 = vadd.xlane.f32.xlu0 %v39
      %v41 = vpop.xlane.xlu0 %40
      %v42 = vmul.f32 %v38, 0.03125
      %v43 = vmul.f32 %v41, 0.03125
      %v44 = vsub.f32 %v33, %v42
      %v45 = vsub.f32 %v34, %v43
      %v46 = vmul.f32 %v44, %v44
      %v47 = vmul.f32 %v45, %v45
      %v48 = vsel %vm35, %v46, 0.0
      %49 = vadd.xlane.f32.xlu0 %v48
      %v50 = vpop.xlane.xlu0 %49
      %v51 = vsel %vm35, %v47, 0.0
      %52 = vadd.xlane.f32.xlu0 %v51
      %v53 = vpop.xlane.xlu0 %52
      %v54 = vmul.f32 %v50, 0.03125
      %v55 = vmul.f32 %v53, 0.03125
      %v56 = vadd.f32 %v54, 1e-05
      %v57 = vadd.f32 %v55, 1e-05
      %v58 = vrsqrt.pop %v56
      %v59 = vrsqrt.pop %v57
      %v60 = vmul.f32 %v44, %v58
      %v61 = vmul.f32 %v45, %v59
      %v62 = vld [vmem:[%s1] sm:$0x1]
      %v64 = vlaneseq
      %v65 = vshrl.u32 %v64, 7
      %v66 = vsub.s32 0, %v65
      %v67 = vrot.slane %v62, %v66
      %v69 = vmul.f32 %v60, %v67
      %v70 = vmul.f32 %v61, %v67
      %v71 = vld [vmem:[%s2] sm:$0x1]
      %v73 = vlaneseq
      %v74 = vshrl.u32 %v73, 7
      %v75 = vsub.s32 0, %v74
      %v76 = vrot.slane %v71, %v75
      %v78 = vadd.f32 %v69, %v76
      %v79 = vadd.f32 %v70, %v76
      %v80 = vpack.c.bf16 %v79, %v78
      %81 = vst.msk [vmem:[#allocation2] sm:$0xff] %vm35, %v80
      %v82 = vld [vmem:[%s6] sm:$0x1]
      %v84 = vlaneseq
      %v85 = vshrl.u32 %v84, 7
      %v86 = vsub.s32 0, %v85
      %v87 = vrot.slane %v82, %v86
      %89 = vst.msk [vmem:[#allocation3] sm:$0xff] %vm35, %v87
      %90 = vst.msk [vmem:[#allocation3 + $0x8] sm:$0xff] %vm35, %v87
    $region33: #{te_naive_net.1} parent=1 // pred_fallthru
      _
    %v91 = vld [vmem:[#allocation2] sm:$0xff]
    %v92 = vld [vmem:[%s3] sm:$0xf]
    %v93 = vld [vmem:[%s3 + $0x4] sm:$0xf]
    %v94 = vld [vmem:[%s3 + $0x8] sm:$0xf]
    %v95 = vld [vmem:[%s3 + $0xc] sm:$0xf]
    %v96 = vld [vmem:[%s4] sm:$0x1]
    %v98 = vlaneseq
    %v99 = vshrl.u32 %v98, 7
    %v100 = vsub.s32 0, %v99
    %v101 = vrot.slane %v96, %v100
    %v107 = vunpack.c.l.b16 %v92
    %v108 = vunpack.c.l.b16 %v93
    %v109 = vunpack.c.l.b16 %v94
    %v110 = vunpack.c.l.b16 %v95
    %v111 = vpack.c.b16 %v108, %v107
    %v112 = vpack.c.b16 %v110, %v109
    %vm115 = vcmask 261120
    %v117 = vsel %vm115, %v91, 0
    %119 = vmatprep.subr.bf16.mxu0 0
    %120 = vmatpush1.bf16.msra.mxu0 %v111
    %121 = vmatprep.subr.bf16.mxu0 0
    %122 = vmatpush1.bf16.msra.mxu0 %v112
    %123 = vmatprep.subr.bf16.mxu0 0
    %124 = vmatpush1.bf16.msra.mxu0 0
    %125 = vmatprep.subr.bf16.mxu0 0
    %126 = vmatpush1.bf16.msra.mxu0 0
    %127 = vmatprep.subr.bf16.mxu0 0
    %128 = vmatpush1.bf16.msra.mxu0 0
    %129 = vmatprep.subr.bf16.mxu0 0
    %130 = vmatpush1.bf16.msra.mxu0 0
    %131 = vmatprep.subr.bf16.mxu0 0
    %132 = vmatpush1.bf16.msra.mxu0 0
    %133 = vmatprep.subr.bf16.mxu0 0
    %134 = vmatpush1.bf16.msra.mxu0 0
    %135 = vmatprep.subr.bf16.mxu0 0
    %136 = vmatpush1.bf16.msra.mxu0 0
    %137 = vmatprep.subr.bf16.mxu0 0
    %138 = vmatpush1.bf16.msra.mxu0 0
    %139 = vmatprep.subr.bf16.mxu0 0
    %140 = vmatpush1.bf16.msra.mxu0 0
    %141 = vmatprep.subr.bf16.mxu0 0
    %142 = vmatpush1.bf16.msra.mxu0 0
    %143 = vmatprep.subr.bf16.mxu0 0
    %144 = vmatpush1.bf16.msra.mxu0 0
    %145 = vmatprep.subr.bf16.mxu0 0
    %146 = vmatpush1.bf16.msra.mxu0 0
    %147 = vmatprep.subr.bf16.mxu0 0
    %148 = vmatpush1.bf16.msra.mxu0 0
    %149 = vmatprep.subr.bf16.mxu0 0
    %150 = vmatpush1.bf16.msra.mxu0 0
    %151 = vmatprep.mubr.bf16.mxu0 0
    %152 = vmatmul.mubr.bf16.gmra.mrb[0].mxu0 %v117
    %v153 = vpop.f32.mrb[0].mxu0
    %v154 = vadd.f32 %v101, %v153
    %v155 = vpop.f32.mrb[0].mxu0
    %v156 = vpop.f32.mrb[0].mxu0
    %v157 = vadd.f32 %v101, %v156
    %v158 = vpop.f32.mrb[0].mxu0
    %159 = vdwg.mxu0
    %v160 = vpack.c.bf16 %v157, %v154
    %v161 = vxor.u32 %v160, 2147516416
    %v163 = vmul.bf16 %v161, 1069105081
    %v164 = vpow.bf16.pop %v163
    %v165 = vadd.bf16 %v164, 1065369472
    %v166 = vrcp.bf16.pop %v165
    %v167 = vmul.bf16 1065369472, %v166
    %v168 = vmul.bf16 %v160, %v167
    %v169 = vld [vmem:[#allocation3] sm:$0xff]
    %v170 = vld [vmem:[#allocation3 + $0x8] sm:$0xff]
    %v171 = vld [vmem:[%s5] sm:$0xf]
    %v172 = vld [vmem:[%s5 + $0x4] sm:$0xf]
    %v173 = vld [vmem:[%s5 + $0x8] sm:$0xf]
    %v174 = vld [vmem:[%s5 + $0xc] sm:$0xf]
    %v175 = vld [vmem:[%s5 + $0x10] sm:$0xf]
    %v176 = vld [vmem:[%s5 + $0x14] sm:$0xf]
    %v177 = vld [vmem:[%s5 + $0x18] sm:$0xf]
    %v178 = vld [vmem:[%s5 + $0x1c] sm:$0xf]
    %v179 = vld [vmem:[%s5 + $0x20] sm:$0xf]
    %v180 = vld [vmem:[%s5 + $0x24] sm:$0xf]
    %v181 = vld [vmem:[%s5 + $0x28] sm:$0xf]
    %v182 = vld [vmem:[%s5 + $0x2c] sm:$0xf]
    %v183 = vld [vmem:[%s5 + $0x30] sm:$0xf]
    %v184 = vld [vmem:[%s5 + $0x34] sm:$0xf]
    %v185 = vld [vmem:[%s5 + $0x38] sm:$0xf]
    %v186 = vld [vmem:[%s5 + $0x3c] sm:$0xf]
    %v203 = vunpack.c.l.b16 %v171
    %v204 = vunpack.c.l.b16 %v172
    %v205 = vunpack.c.l.b16 %v173
    %v206 = vunpack.c.l.b16 %v174
    %v207 = vunpack.c.l.b16 %v175
    %v208 = vunpack.c.l.b16 %v176
    %v209 = vunpack.c.l.b16 %v177
    %v210 = vunpack.c.l.b16 %v178
    %v211 = vunpack.c.l.b16 %v179
    %v212 = vunpack.c.l.b16 %v180
    %v213 = vunpack.c.l.b16 %v181
    %v214 = vunpack.c.l.b16 %v182
    %v215 = vunpack.c.l.b16 %v183
    %v216 = vunpack.c.l.b16 %v184
    %v217 = vunpack.c.l.b16 %v185
    %v218 = vunpack.c.l.b16 %v186
    %v219 = vpack.c.b16 %v204, %v203
    %v220 = vpack.c.b16 %v206, %v205
    %v221 = vpack.c.b16 %v208, %v207
    %v222 = vpack.c.b16 %v210, %v209
    %v223 = vpack.c.b16 %v212, %v211
    %v224 = vpack.c.b16 %v214, %v213
    %v225 = vpack.c.b16 %v216, %v215
    %v226 = vpack.c.b16 %v218, %v217
    %235 = vmatprep.subr.bf16.mxu0 0
    %236 = vmatpush1.bf16.msra.mxu0 %v219
    %237 = vmatprep.subr.bf16.mxu0 0
    %238 = vmatpush1.bf16.msra.mxu0 %v220
    %239 = vmatprep.subr.bf16.mxu0 0
    %240 = vmatpush1.bf16.msra.mxu0 %v221
    %241 = vmatprep.subr.bf16.mxu0 0
    %242 = vmatpush1.bf16.msra.mxu0 %v222
    %243 = vmatprep.subr.bf16.mxu0 0
    %244 = vmatpush1.bf16.msra.mxu0 %v223
    %245 = vmatprep.subr.bf16.mxu0 0
    %246 = vmatpush1.bf16.msra.mxu0 %v224
    %247 = vmatprep.subr.bf16.mxu0 0
    %248 = vmatpush1.bf16.msra.mxu0 %v225
    %249 = vmatprep.subr.bf16.mxu0 0
    %250 = vmatpush1.bf16.msra.mxu0 %v226
    %251 = vmatprep.subr.bf16.mxu0 0
    %252 = vmatpush1.bf16.msra.mxu0 0
    %253 = vmatprep.subr.bf16.mxu0 0
    %254 = vmatpush1.bf16.msra.mxu0 0
    %255 = vmatprep.subr.bf16.mxu0 0
    %256 = vmatpush1.bf16.msra.mxu0 0
    %257 = vmatprep.subr.bf16.mxu0 0
    %258 = vmatpush1.bf16.msra.mxu0 0
    %259 = vmatprep.subr.bf16.mxu0 0
    %260 = vmatpush1.bf16.msra.mxu0 0
    %261 = vmatprep.subr.bf16.mxu0 0
    %262 = vmatpush1.bf16.msra.mxu0 0
    %263 = vmatprep.subr.bf16.mxu0 0
    %264 = vmatpush1.bf16.msra.mxu0 0
    %265 = vmatprep.subr.bf16.mxu0 0
    %266 = vmatpush1.bf16.msra.mxu0 0
    %267 = vmatprep.mubr.bf16.mxu0 0
    %268 = vmatmul.mubr.bf16.gmra.mrb[0].mxu0 %v168
    %v269 = vpop.f32.mrb[0].mxu0
    %v270 = vadd.f32 0.0, %v269
    %v271 = vpop.f32.mrb[0].mxu0
    %v272 = vpop.f32.mrb[0].mxu0
    %v273 = vadd.f32 0.0, %v272
    %v274 = vpop.f32.mrb[0].mxu0
    %275 = vdwg.mxu0
    %v276 = vadd.f32 %v169, %v270
    %v277 = vadd.f32 %v170, %v273
    %278 = vst.msk [vmem:[#allocation3] sm:$0xff] %vm115, %v276
    %279 = vst.msk [vmem:[#allocation3 + $0x8] sm:$0xff] %vm115, %v277
    // Predicated region
    $region34: #{te_naive_net.1} parent=1 // pred_check
      %p280 = pneg %p29
    $region35: #{te_naive_net.1} parent=1 // pred_check_branch
      %282 = sbr.rel (%p280) target = $region37
    $region36: #{te_naive_net.1} parent=1 // pred_region
      %v283 = vld [vmem:[#allocation3] sm:$0xff]
      %v284 = vld [vmem:[#allocation3 + $0x8] sm:$0xff]
      %285 = vst.msk [vmem:[#allocation4] sm:$0xff] %vm115, %v283
      %286 = vst.msk [vmem:[#allocation4 + $0x8] sm:$0xff] %vm115, %v284
    $region37: #{te_naive_net.1} parent=1 // pred_fallthru
      _
    // Predicated region
    $region38: #{te_naive_net.1} parent=1 // pred_check
      _
    $region39: #{te_naive_net.1} parent=1 // pred_check_branch
      %288 = sbr.rel (0) target = $region41
    $region40: #{te_naive_net.1} parent=1 // pred_region
      %s290 = ssub.s32 256, 256
      %291 = vsyncadd [#allocation5], %s290
      %s292 = sshll.u32 [#allocation4], 4
      %s293 = int_to_ptr.vmem [resolvable:$true] %s292
      %298 = dma.vmem_to_hbm [thread:$0]  %s293, 256, %s7, [#allocation5], 128, 128, 8
    $region41: #{te_naive_net.1} parent=1 // pred_fallthru
      _
    // Predicated region
    $region42: #{te_naive_net.1} parent=1 // pred_check
      _
    $region43: #{te_naive_net.1} parent=1 // pred_check_branch
      %300 = sbr.rel (0) target = $region45
    $region44: #{te_naive_net.1} parent=1 // pred_region
      %301 = dma.done [#allocation5], 256
    $region45: #{te_naive_net.1} parent=1 // pred_fallthru
      _
    %302 = vsyncpa [#allocation5], 1

</llo_original>
